<compile_context>
chip_gen: v5e
topology: v5e:2x2
jax: 0.10.0
libtpu: 0.0.40
codegen_flags: <defaults>
</compile_context>

<pallas_src>
import functools

import numpy as np
import jax
import jax.numpy as jnp
from jax import lax
from jax.experimental import pallas as pl
from jax.experimental.pallas import tpu as pltpu


def gkern(l=5, sig=1.0):
    """2-D Gaussian kernel, identical to the PyTorch module's gkern()."""
    ax = np.linspace(-(l - 1) / 2.0, (l - 1) / 2.0, l)
    xx, yy = np.meshgrid(ax, ax)
    kernel = np.exp(-0.5 * (np.square(xx) + np.square(yy)) / np.square(sig))
    return kernel / np.sum(kernel)


def gkern1d(l=5, sig=1.0):
    """1-D taps g with outer(g, g) == gkern(l, sig) (the Gaussian is separable)."""
    ax = np.linspace(-(l - 1) / 2.0, (l - 1) / 2.0, l)
    e = np.exp(-0.5 * np.square(ax) / np.square(sig))
    return e / np.sum(e)


@functools.lru_cache(maxsize=None)
def _probe_roll_direction():
    """Returns +1 if pltpu.roll follows np.roll (element i -> i+shift), else -1.

    Tiny one-time probe; must run eagerly (it is — smooth_forward is not jitted
    here).  Keeps the host-precomputed boundary masks correct on any backend.
    """
    def probe(x_ref, o_ref):
        o_ref[...] = pltpu.roll(x_ref[...], 1, 1)

    x = jnp.broadcast_to(jnp.arange(128, dtype=jnp.float32)[None, :], (8, 128))
    y = pl.pallas_call(probe, out_shape=jax.ShapeDtypeStruct((8, 128), jnp.float32))(x)
    first = float(y[0, 0])
    if first == 127.0:      # np.roll convention: old last element wrapped to front
        return 1
    if first == 1.0:        # opposite convention
        return -1
    raise RuntimeError(f"unexpected pltpu.roll behaviour: y[0,0]={first}")


def _tap_tables(ks, pad, H, W, lanes, sig=1.0):
    """(2*ks, lanes) f32 table: rows 0..ks-1 vertical taps * row-validity mask,
    rows ks..2*ks-1 horizontal taps * column-validity mask (0 outside image)."""
    taps = gkern1d(ks, sig)
    HW = H * W
    l = np.arange(lanes)
    yy = l // W
    xx = l % W
    in_img = (l < HW)
    tab = np.zeros((2 * ks, lanes), np.float32)
    for k in range(ks):
        d = k - pad
        tab[k] = taps[k] * (in_img & (yy + d >= 0) & (yy + d < H)).astype(np.float32)
        tab[ks + k] = taps[k] * (in_img & (xx + d >= 0) & (xx + d < W)).astype(np.float32)
    return tab


def _smooth_kernel(x_ref, tab_ref, o_ref, *, ks, pad, W, lanes, roll_dir):
    """Separable depthwise Gaussian blur on a lane-dense (rows, H*W) slab.

    x_ref   : (block_nc, lanes) rows = (n, c) images, lanes = (h, w) pixels
    tab_ref : (2*ks, lanes) f32 static masked tap tables (see _tap_tables)
    o_ref   : (block_nc, lanes) blurred output, same layout as x_ref
    """
    x = x_ref[...].astype(jnp.float32)

    def tap_pass(src, row0, unit):
        # centre tap: no roll, in-image mask is all ones
        acc = src * tab_ref[row0 + pad:row0 + pad + 1, :]
        for k in range(ks):
            if k == pad:
                continue
            d = (k - pad) * unit                      # static source offset (lanes)
            shift = (-roll_dir * d) % lanes           # so rolled[l] == src[l + d]
            rolled = pltpu.roll(src, shift, 1)        # XLU slot
            acc = acc + rolled * tab_ref[row0 + k:row0 + k + 1, :]
        return acc

    tmp = tap_pass(x, 0, W)        # vertical pass:   row offsets -> lane rolls by ±k*W
    out = tap_pass(tmp, ks, 1)     # horizontal pass: col offsets -> lane rolls by ±1..pad
    o_ref[...] = out.astype(o_ref.dtype)


def _pick_block_rows(nc, lanes, itemsize, budget_bytes=8 << 20):
    """Largest row tile (multiple of 8, or the full NC axis) within a VMEM budget
    that still fits v7x's 32 MiB scoped default with double buffering."""
    per_row = 4 * lanes * max(itemsize, 4)            # ~2x(in block) + 2x(out block)
    max_rows = max(1, budget_bytes // per_row)
    if nc <= max_rows:
        return nc
    for r in range((min(nc, max_rows) // 8) * 8, 0, -8):
        if nc % r == 0:
            return r
    return nc                                          # fallback: single block


def smooth_forward(x, kernel_size, padding, sig=1.0):
    """Equivalent of Smooth.forward: F.conv2d(x, gkern, padding, groups=C)."""
    N, C, H, W = x.shape
    ks, pad = int(kernel_size), int(padding)
    if 2 * pad != ks - 1:
        # TODO(synk): general padding (output size != input size) needs an
        # output remap; only the module's 'same'-conv configuration is done.
        raise NotImplementedError("requires 2*padding == kernel_size - 1")

    NC = N * C
    HW = H * W
    lanes = ((HW + 127) // 128) * 128            # keep output stores unmasked vst
    roll_dir = _probe_roll_direction()

    # reshape-only layout (free bitcast, no HBM transpose): (N,C,H,W) -> (NC, HW)
    x2d = x.reshape(NC, HW)
    if lanes != HW:
        x2d = jnp.pad(x2d, ((0, 0), (0, lanes - HW)))

    tab = jnp.asarray(_tap_tables(ks, pad, H, W, lanes, sig))

    block_nc = _pick_block_rows(NC, lanes, x.dtype.itemsize)
    grid = (NC // block_nc,)

    kernel = functools.partial(_smooth_kernel, ks=ks, pad=pad, W=W,
                               lanes=lanes, roll_dir=roll_dir)
    out2d = pl.pallas_call(
        kernel,
        out_shape=jax.ShapeDtypeStruct((NC, lanes), x.dtype),
        grid_spec=pltpu.PrefetchScalarGridSpec(
            num_scalar_prefetch=0,
            grid=grid,                            # tile only the NC (row) axis;
            in_specs=[                            # lane axis stays whole so the
                pl.BlockSpec((block_nc, lanes), lambda i: (i, 0)),   # roll+mask
                pl.BlockSpec((2 * ks, lanes), lambda i: (0, 0)),     # scheme is exact
            ],
            out_specs=pl.BlockSpec((block_nc, lanes), lambda i: (i, 0)),
        ),
        compiler_params=pltpu.CompilerParams(
            dimension_semantics=("parallel",)),   # megacore split on v7x
    )(x2d, tab)

    if lanes != HW:
        out2d = out2d[:, :HW]
    return out2d.reshape(N, C, H, W)


if __name__ == "__main__":
    # Module config: Smooth(n_channels=4, kernel_size=5, padding=2); N=2, 16x16.
    n_channels, kernel_size, padding = 4, 5, 2
    N, H, W = 2, 16, 16

    key = jax.random.PRNGKey(0)
    x = jax.random.normal(key, (N, n_channels, H, W), dtype=jnp.float32)

    out = smooth_forward(x, kernel_size, padding)
    out = jax.block_until_ready(out)

    # Reference: XLA depthwise conv with the module's (ks, ks) Gaussian weights.
    k2d = jnp.asarray(gkern(kernel_size, 1.0), dtype=jnp.float32)
    w = jnp.broadcast_to(k2d, (n_channels, 1, kernel_size, kernel_size))
    ref = lax.conv_general_dilated(
        x, w, window_strides=(1, 1),
        padding=[(padding, padding), (padding, padding)],
        dimension_numbers=("NCHW", "OIHW", "NCHW"),
        feature_group_count=n_channels)
    assert out.shape == ref.shape
    assert jnp.allclose(out, ref, atol=1e-4, rtol=1e-4)

    print("KERNEL_OK")
</pallas_src>

<mosaic_0001>
module attributes {stable_mosaic.version = 11 : i64} {
  func.func @probe(%arg0: memref<8x128xf32, #tpu.memory_space<vmem>>, %arg1: memref<8x128xf32, #tpu.memory_space<vmem>>) attributes {dimension_semantics = [], scalar_prefetch = 0 : i64, scratch_operands = 0 : i64, tpu.core_type = #tpu.core_type<tc>} {
    %c0 = arith.constant 0 : index
    %c0_0 = arith.constant 0 : index
    %0 = vector.load %arg0[%c0, %c0_0] : memref<8x128xf32, #tpu.memory_space<vmem>>, vector<8x128xf32>
    %c1_i32 = arith.constant 1 : i32
    %1 = tpu.dynamic_rotate %0 by %c1_i32 dim 1 : vector<8x128xf32>, i32 -> vector<8x128xf32>
    %c0_1 = arith.constant 0 : index
    %c0_2 = arith.constant 0 : index
    %2 = vector.load %arg1[%c0_1, %c0_2] : memref<8x128xf32, #tpu.memory_space<vmem>>, vector<8x128xf32>
    tpu.vector_store %arg1[%c0_1, %c0_2], %1 {strides = array<i32>} : memref<8x128xf32, #tpu.memory_space<vmem>>, vector<8x128xf32>,
    return
  }
}

</mosaic_0001>

<llo_original>
// kernel: tpu_custom_call.1
$region0: #{tpu_custom_call.1}
  #allocation0 [shape = 'u32[]', space=smem, size = 0x4, offset = 0x4, fixed_abs, tag = 'smem constant byte address 0x4 - core index']
  #allocation1 [shape = 'u32[72,128]{1,0:T(1,128)}', space=vmem, size = 0x9000, scoped, tag = 'internal scratch']
  %s0 = inlined_call_operand.hbm [shape: f32[8,128], index: 0, kind: input, shape index: {}]
  %s1 = inlined_call_operand.hbm [shape: f32[8,128], index: 1, kind: output, shape index: {}]
  %s2 = sld [smem:[#allocation0]]
  $region18: #{tpu_custom_call.1} parent=0
    _
  %s4 = ssub.s32 1, %s2
  %s5 = scalar_select 0, %s4, %s2
  $region1: #{tpu_custom_call.1} parent=0
    #allocation2 [shape = 'u8[4096]{0}', space=vmem, size = 0x1000, scoped, tag = 'input window, operand 0, single buffered']
    #allocation3 [shape = 's32[1]{0}', space=sflag, size = 0x4, scoped, tag = 'scoped memory for tpu_custom_call.1']
    #allocation4 [shape = 's32[1]{0}', space=sflag, size = 0x4, scoped, tag = 'scoped memory for tpu_custom_call.1']
    #allocation5 [shape = 'u8[4096]{0}', space=vmem, size = 0x1000, scoped, tag = 'output window, operand 0, single buffered']
    %6 = vsyncpa [#allocation3], 0
    %7 = vsyncpa [#allocation4], 0
    // Predicated region
    $region2: #{tpu_custom_call.1} parent=1 // pred_check
      _
    $region3: #{tpu_custom_call.1} parent=1 // pred_check_branch
      %9 = sbr.rel (0) target = $region5
    $region4: #{tpu_custom_call.1} parent=1 // pred_region
      %11 = vsyncadd [#allocation3], 0
      %s13 = sshll.u32 %s0, 4
      %s14 = int_to_ptr.hbm [resolvable:$true] %s13
      %s15 = sshll.u32 [#allocation2], 4
      %s16 = int_to_ptr.vmem [resolvable:$true] %s15
      %18 = dma.hbm_to_vmem [thread:$0]  %s14, 128, %s16, [#allocation3]
    $region5: #{tpu_custom_call.1} parent=1 // pred_fallthru
      _
    // Predicated region
    $region6: #{tpu_custom_call.1} parent=1 // pred_check
      _
    $region7: #{tpu_custom_call.1} parent=1 // pred_check_branch
      %20 = sbr.rel (0) target = $region9
    $region8: #{tpu_custom_call.1} parent=1 // pred_region
      %22 = dma.done [#allocation3], 128
    $region9: #{tpu_custom_call.1} parent=1 // pred_fallthru
      _
    %v23 = vld [vmem:[#allocation2] sm:$0xff]
    %24 = vrot.lane.b32.xlu0 %v23, 1
    %v25 = vpop.permute.xlu0 %24
    %26 = vst [vmem:[#allocation5] sm:$0xff] %v25
    // Predicated region
    $region10: #{tpu_custom_call.1} parent=1 // pred_check
      _
    $region11: #{tpu_custom_call.1} parent=1 // pred_check_branch
      %28 = sbr.rel (0) target = $region13
    $region12: #{tpu_custom_call.1} parent=1 // pred_region
      %30 = vsyncadd [#allocation4], 0
      %s32 = sshll.u32 [#allocation5], 4
      %s33 = int_to_ptr.vmem [resolvable:$true] %s32
      %s34 = sshll.u32 %s1, 4
      %s35 = int_to_ptr.hbm [resolvable:$true] %s34
      %37 = dma.vmem_to_hbm [thread:$0]  %s33, 128, %s35, [#allocation4]
    $region13: #{tpu_custom_call.1} parent=1 // pred_fallthru
      _
    // Predicated region
    $region14: #{tpu_custom_call.1} parent=1 // pred_check
      _
    $region15: #{tpu_custom_call.1} parent=1 // pred_check_branch
      %39 = sbr.rel (0) target = $region17
    $region16: #{tpu_custom_call.1} parent=1 // pred_region
      %41 = dma.done [#allocation4], 128
    $region17: #{tpu_custom_call.1} parent=1 // pred_fallthru
      _
    %42 = vsyncpa [#allocation3], 1
    %43 = vsyncpa [#allocation4], 1

</llo_original>
